<compile_context>
chip_gen: v5e
topology: v5e:2x2
jax: 0.10.0
libtpu: 0.0.40
codegen_flags: <defaults>
</compile_context>

<pallas_src>
from typing import NamedTuple, Tuple

import jax
import jax.numpy as jnp
from jax.experimental import pallas as pl
from jax.experimental.pallas import tpu as pltpu

_LANE = 128
_SUBLANE = 8


def _round_up(x, m):
    return ((x + m - 1) // m) * m


def _vmem_budget_bytes():
    """~85% of detected per-core VMEM (headroom for Mosaic scratch/semaphores).
    v7x: ~54 MiB of 64; v5e/v6e: ~109 MiB of 128; falls back to 64 MiB."""
    cap = 64 << 20
    try:
        info = pltpu.get_tpu_info()
        c = getattr(info, "vmem_capacity_bytes", None)
        if c:
            cap = int(c)
    except Exception:
        pass
    return int(cap * 0.85)


# ----------------------------------------------------------------------------
# Kernel
# ----------------------------------------------------------------------------
def make_mlp_kernel(num_linear, out_dim, softmax, normalize, sigmoid,
                    compute_dtype):
    """`num_linear` Linear layers with ReLU between them, then optional
    softmax / L2-normalize / sigmoid epilogues (row-local -> batch tiling is
    safe).  `out_dim` is the unpadded output width; padded lanes are masked
    out of the softmax max/denominator.  Epilogues run in f32."""

    def kernel(x_ref, *refs):
        out_ref = refs[-1]
        param_refs = refs[:-1]          # interleaved (w0, b0, w1, b1, ...)

        h = x_ref[...]
        for li in range(num_linear):
            w = param_refs[2 * li][...]        # (in_pad, out_pad), compute dtype
            b = param_refs[2 * li + 1][...]    # (1, out_pad), f32
            # MXU operands in the compute dtype (bf16 default); f32 accumulate.
            h = jnp.dot(h.astype(compute_dtype), w,
                        preferred_element_type=jnp.float32) + b
            if li < num_linear - 1:            # ReLU after all but the last
                h = jnp.maximum(h, 0.0)

        out_pad = h.shape[-1]

        if softmax:  # softmax over dim=1 (feature axis), padded lanes masked
            if out_pad != out_dim:
                lane = jax.lax.broadcasted_iota(jnp.int32, h.shape, 1)
                h = jnp.where(lane < out_dim, h, jnp.float32(-1e30))
            m = jnp.max(h, axis=1, keepdims=True)
            e = jnp.exp(h - m)
            denom = jnp.sum(e, axis=1, keepdims=True)
            h = e * pl.reciprocal(denom, approx=True)   # EUP slot, frees VALU

        if normalize:  # F.normalize: L2 over dim=1, eps=1e-12
            # Padded output lanes are exactly zero -> no masking needed.
            ssq = jnp.sum(h * h, axis=1, keepdims=True)
            h = h * jax.lax.rsqrt(jnp.maximum(ssq, jnp.float32(1e-24)))

        if sigmoid:
            h = jax.nn.sigmoid(h)

        out_ref[...] = h.astype(out_ref.dtype)

    return kernel


# ----------------------------------------------------------------------------
# Parameter preparation (pad + cast ONCE, reuse across forward calls)
# ----------------------------------------------------------------------------
class PreparedMLPParams(NamedTuple):
    flat: Tuple[jax.Array, ...]     # (w0, b0, w1, b1, ...) padded + cast
    dims_pad: Tuple[int, ...]       # padded feature dims, len = num_linear + 1
    in_dim: int
    out_dim: int
    num_linear: int
    compute_dtype: jnp.dtype
    param_bytes: int


def prepare_mlp_params(params, compute_dtype=None):
    """Pad feature dims to multiples of 128 and cast to the compute dtype once.
    `params` is a list of (W, b) with W of shape (in_features, out_features),
    i.e. already transposed vs. torch.nn.Linear.weight.  Default compute dtype
    is bf16 for f32 params (f32 accumulation stays in the kernel); narrower
    caller-provided dtypes are kept as-is."""
    if compute_dtype is None:
        p_dt = jnp.dtype(params[0][0].dtype)
        # TODO(synk): optional fp8 weight path for v7x inference heads.
        compute_dtype = p_dt if p_dt.itemsize <= 2 else jnp.dtype(jnp.bfloat16)
    compute_dtype = jnp.dtype(compute_dtype)

    in_dim = int(params[0][0].shape[0])
    out_dim = int(params[-1][0].shape[1])
    dims = [in_dim] + [int(w.shape[1]) for (w, _) in params]
    dims_pad = tuple(_round_up(d, _LANE) for d in dims)

    flat = []
    for li, (w, b) in enumerate(params):
        fi, fo = w.shape
        fi_p, fo_p = dims_pad[li], dims_pad[li + 1]
        w_p = jnp.zeros((fi_p, fo_p), compute_dtype)
        w_p = w_p.at[:fi, :fo].set(w.astype(compute_dtype))
        b_p = jnp.zeros((1, fo_p), jnp.float32)
        b_p = b_p.at[0, :fo].set(b.astype(jnp.float32))
        flat += [w_p, b_p]
    param_bytes = sum(int(a.size) * a.dtype.itemsize for a in flat)
    return PreparedMLPParams(tuple(flat), dims_pad, in_dim, out_dim,
                             len(params), compute_dtype, int(param_bytes))


# ----------------------------------------------------------------------------
# Forward wrapper
# ----------------------------------------------------------------------------
def mlp_forward(x, params, *, softmax=False, normalize=False, sigmoid=False,
                batch_tile=None, compute_dtype=None, out_dtype=None,
                x_buffers=2):
    """Fused MLP forward.

    params: either a list of (W, b) (padded/cast per call) or a
            PreparedMLPParams from prepare_mlp_params() (recommended: pad once,
            reuse).  compute_dtype is ignored when PreparedMLPParams is given.
    batch_tile: None -> derived from the VMEM budget (128..512), clamped so the
            grid has >=2 steps on large batches (v7x megacore sharding).
    out_dtype: output dtype (default x.dtype); pass bf16 to halve writeback.
    x_buffers: pipeline depth for the x tiles (3 can help shallow, wide-input,
            memory-bound MLPs)."""
    if not isinstance(params, PreparedMLPParams):
        params = prepare_mlp_params(params, compute_dtype)
    pp = params
    compute_dtype = pp.compute_dtype

    B, in_dim = x.shape
    assert in_dim == pp.in_dim, (in_dim, pp.in_dim)
    out_dtype = jnp.dtype(out_dtype) if out_dtype is not None else jnp.dtype(x.dtype)

    dims_pad = pp.dims_pad
    itemsize = compute_dtype.itemsize
    vmem_budget = _vmem_budget_bytes()

    if pp.param_bytes > int(0.75 * vmem_budget):
        # TODO(synk): add the weight-streaming path (see header) instead of
        # failing; resident-only is fine for the model sizes this module uses.
        raise NotImplementedError(
            "Resident weights (%d B) exceed the per-core VMEM budget (%d B)."
            % (pp.param_bytes, vmem_budget))

    # ---- VMEM-budget-driven batch tile -------------------------------------
    row_bytes = (x_buffers * dims_pad[0] * itemsize          # pipelined x
                 + 2 * dims_pad[-1] * out_dtype.itemsize     # pipelined out
                 + 3 * max(dims_pad) * 4)                    # f32 live acts
    if batch_tile is None:
        avail = max(vmem_budget - pp.param_bytes, row_bytes)
        batch_tile = int(avail // row_bytes)
        batch_tile = max(128, min(batch_tile, 512))
        batch_tile = (batch_tile // 128) * 128
    batch_tile = min(int(batch_tile), _round_up(max(B, 1), _SUBLANE))
    batch_tile = _round_up(batch_tile, _SUBLANE)
    b_pad = _round_up(max(B, 1), batch_tile)
    # v7x has 2 TensorCores: prefer >=2 grid steps when tiles stay >=128 rows.
    if b_pad // batch_tile == 1 and B >= 2 * _LANE:
        batch_tile = _round_up(-(-B // 2), _LANE)
        b_pad = _round_up(B, batch_tile)

    # ---- input padding (skipped when already aligned) -----------------------
    if b_pad == B and dims_pad[0] == in_dim and x.dtype == compute_dtype:
        x_p = x
    else:
        x_p = jnp.zeros((b_pad, dims_pad[0]), compute_dtype)
        x_p = x_p.at[:B, :in_dim].set(x.astype(compute_dtype))

    # ---- specs --------------------------------------------------------------
    x_spec_kwargs = {}
    if x_buffers != 2:
        x_spec_kwargs["pipeline_mode"] = pl.Buffered(int(x_buffers))
    x_spec = pl.BlockSpec((batch_tile, dims_pad[0]), lambda i: (i, 0),
                          **x_spec_kwargs)
    # Weights/biases are grid-invariant: single resident VMEM copy, no
    # per-step double buffering.
    resident = pl.BlockSpec(memory_space=pltpu.MemorySpace.VMEM)
    in_specs = [x_spec] + [resident] * (2 * pp.num_linear)

    kernel = make_mlp_kernel(pp.num_linear, pp.out_dim, softmax, normalize,
                             sigmoid, compute_dtype)

    # ---- explicit VMEM limit (within the generation-aware budget) -----------
    io_bytes = batch_tile * (x_buffers * dims_pad[0] * itemsize
                             + 2 * dims_pad[-1] * out_dtype.itemsize)
    interm_bytes = 4 * batch_tile * max(dims_pad) * 4
    vmem_limit = int(1.3 * (pp.param_bytes + io_bytes + interm_bytes)) + (4 << 20)
    vmem_limit = max(16 << 20, min(vmem_limit, vmem_budget))

    flops = 2 * b_pad * sum(dims_pad[i] * dims_pad[i + 1]
                            for i in range(pp.num_linear))
    transcendentals = (b_pad * dims_pad[-1] * (int(softmax) + int(sigmoid))
                       + b_pad * int(normalize))
    bytes_accessed = (b_pad * dims_pad[0] * itemsize + pp.param_bytes
                      + b_pad * dims_pad[-1] * out_dtype.itemsize)

    out_p = pl.pallas_call(
        kernel,
        grid=(b_pad // batch_tile,),
        in_specs=in_specs,
        out_specs=pl.BlockSpec((batch_tile, dims_pad[-1]), lambda i: (i, 0)),
        out_shape=jax.ShapeDtypeStruct((b_pad, dims_pad[-1]), out_dtype),
        compiler_params=pltpu.CompilerParams(
            dimension_semantics=("parallel",),   # shards steps across v7x TCs
            vmem_limit_bytes=int(vmem_limit)),
        cost_estimate=pl.CostEstimate(
            flops=int(flops),
            transcendentals=int(transcendentals),
            bytes_accessed=int(bytes_accessed)),
    )(x_p, *pp.flat)

    return out_p[:B, :pp.out_dim]


# ----------------------------------------------------------------------------
# Reference / init helpers
# ----------------------------------------------------------------------------
def init_mlp_params(key, in_dim, embed_dim, out_dim, num_layers):
    """Deterministic init mimicking nn.Linear's uniform(-1/sqrt(fan_in), ...)."""
    dims = [in_dim, embed_dim] + [embed_dim] * num_layers + [out_dim]
    params = []
    for fan_in, fan_out in zip(dims[:-1], dims[1:]):
        key, kw, kb = jax.random.split(key, 3)
        bound = 1.0 / (fan_in ** 0.5)
        # Stored as (in_features, out_features): already transposed vs PyTorch.
        w = jax.random.uniform(kw, (fan_in, fan_out), jnp.float32, -bound, bound)
        b = jax.random.uniform(kb, (fan_out,), jnp.float32, -bound, bound)
        params.append((w, b))
    return params


def mlp_reference(x, params, *, softmax=False, normalize=False, sigmoid=False):
    h = x
    for li, (w, b) in enumerate(params):
        h = h @ w + b
        if li < len(params) - 1:
            h = jnp.maximum(h, 0.0)
    if softmax:
        h = jax.nn.softmax(h, axis=1)
    if normalize:
        h = h / jnp.maximum(jnp.linalg.norm(h, axis=1, keepdims=True), 1e-12)
    if sigmoid:
        h = jax.nn.sigmoid(h)
    return h


if __name__ == "__main__":
    # Small shapes consistent with the module: MLP(in_dim, embed_dim, out_dim,
    # num_layers=1, ...) applied to a (batch, in_dim) input.
    batch, in_dim, embed_dim, out_dim, num_layers = 16, 16, 32, 8, 1

    key = jax.random.PRNGKey(0)
    kx, kp = jax.random.split(key)
    x = jax.random.normal(kx, (batch, in_dim), dtype=jnp.float32)
    params = init_mlp_params(kp, in_dim, embed_dim, out_dim, num_layers)

    # Pad & cast the parameters ONCE and reuse across calls (no per-call
    # padding traffic).  Default compute path is bf16; also build an exact
    # f32 path for a tight-tolerance check.
    prepped_bf16 = prepare_mlp_params(params)                  # bf16 MXU path
    prepped_f32 = prepare_mlp_params(params, jnp.float32)      # exact path

    # Config 1: softmax head (bf16 MXU + EUP approx reciprocal -> loose tol).
    out_sm = jax.block_until_ready(mlp_forward(x, prepped_bf16, softmax=True))
    ref_sm = mlp_reference(x, params, softmax=True)
    assert out_sm.shape == (batch, out_dim)
    assert jnp.allclose(out_sm, ref_sm, atol=3e-2, rtol=3e-2), \
        float(jnp.max(jnp.abs(out_sm - ref_sm)))

    # Config 2: L2-normalize + sigmoid head (bf16 compute).
    out_ns = jax.block_until_ready(
        mlp_forward(x, prepped_bf16, normalize=True, sigmoid=True))
    ref_ns = mlp_reference(x, params, normalize=True, sigmoid=True)
    assert out_ns.shape == (batch, out_dim)
    assert jnp.allclose(out_ns, ref_ns, atol=3e-2, rtol=3e-2), \
        float(jnp.max(jnp.abs(out_ns - ref_ns)))

    # Config 3: plain MLP head, f32 compute path, tight tolerance.
    out_pl = jax.block_until_ready(mlp_forward(x, prepped_f32))
    ref_pl = mlp_reference(x, params)
    assert out_pl.shape == (batch, out_dim)
    assert jnp.allclose(out_pl, ref_pl, atol=1e-4, rtol=1e-4), \
        float(jnp.max(jnp.abs(out_pl - ref_pl)))

    print("KERNEL_OK")
</pallas_src>

<mosaic_0001>
module attributes {stable_mosaic.version = 11 : i64} {
  func.func @kernel(%arg0: i32, %arg1: memref<16x128xbf16, #tpu.memory_space<vmem>>, %arg2: memref<128x128xbf16, #tpu.memory_space<vmem>>, %arg3: memref<1x128xf32, #tpu.memory_space<vmem>>, %arg4: memref<128x128xbf16, #tpu.memory_space<vmem>>, %arg5: memref<1x128xf32, #tpu.memory_space<vmem>>, %arg6: memref<128x128xbf16, #tpu.memory_space<vmem>>, %arg7: memref<1x128xf32, #tpu.memory_space<vmem>>, %arg8: memref<16x128xf32, #tpu.memory_space<vmem>>) attributes {dimension_semantics = [#tpu.dimension_semantics<parallel>], iteration_bounds = array<i64: 1>, scalar_prefetch = 0 : i64, scratch_operands = 0 : i64, tpu.core_type = #tpu.core_type<tc>, window_params = [{transform_indices = @transform_0, window_bounds = array<i64: 16, 128>}, {pipeline_mode = #tpu.pipeline_mode<synchronous>, transform_indices = @transform_1, window_bounds = array<i64: 128, 128>}, {pipeline_mode = #tpu.pipeline_mode<synchronous>, transform_indices = @transform_2, window_bounds = array<i64: 1, 128>}, {pipeline_mode = #tpu.pipeline_mode<synchronous>, transform_indices = @transform_3, window_bounds = array<i64: 128, 128>}, {pipeline_mode = #tpu.pipeline_mode<synchronous>, transform_indices = @transform_4, window_bounds = array<i64: 1, 128>}, {pipeline_mode = #tpu.pipeline_mode<synchronous>, transform_indices = @transform_5, window_bounds = array<i64: 128, 128>}, {pipeline_mode = #tpu.pipeline_mode<synchronous>, transform_indices = @transform_6, window_bounds = array<i64: 1, 128>}, {transform_indices = @transform_7, window_bounds = array<i64: 16, 128>}]} {
    %c0 = arith.constant 0 : index
    %c0_0 = arith.constant 0 : index
    %0 = vector.load %arg1[%c0, %c0_0] : memref<16x128xbf16, #tpu.memory_space<vmem>>, vector<16x128xbf16>
    %c0_1 = arith.constant 0 : index
    %c0_2 = arith.constant 0 : index
    %1 = vector.load %arg2[%c0_1, %c0_2] : memref<128x128xbf16, #tpu.memory_space<vmem>>, vector<128x128xbf16>
    %c0_3 = arith.constant 0 : index
    %c0_4 = arith.constant 0 : index
    %2 = vector.load %arg3[%c0_3, %c0_4] : memref<1x128xf32, #tpu.memory_space<vmem>>, vector<1x128xf32>
    %cst = arith.constant dense<0.000000e+00> : vector<16x128xf32>
    %3 = tpu.matmul %0, %1, %cst {dimension_numbers = #tpu.dot_dimension_numbers<[1], [0], [0], [1], [0, 0, 1, 1], [], []>} : vector<16x128xbf16>, vector<128x128xbf16>, vector<16x128xf32> -> vector<16x128xf32>
    %4 = vector.broadcast %2 : vector<1x128xf32> to vector<16x128xf32>
    %5 = arith.addf %3, %4 : vector<16x128xf32>
    %cst_5 = arith.constant 0.000000e+00 : f32
    %6 = vector.broadcast %cst_5 : f32 to vector<16x128xf32>
    %7 = arith.maximumf %5, %6 : vector<16x128xf32>
    %c0_6 = arith.constant 0 : index
    %c0_7 = arith.constant 0 : index
    %8 = vector.load %arg4[%c0_6, %c0_7] : memref<128x128xbf16, #tpu.memory_space<vmem>>, vector<128x128xbf16>
    %c0_8 = arith.constant 0 : index
    %c0_9 = arith.constant 0 : index
    %9 = vector.load %arg5[%c0_8, %c0_9] : memref<1x128xf32, #tpu.memory_space<vmem>>, vector<1x128xf32>
    %10 = arith.truncf %7 : vector<16x128xf32> to vector<16x128xbf16>
    %cst_10 = arith.constant dense<0.000000e+00> : vector<16x128xf32>
    %11 = tpu.matmul %10, %8, %cst_10 {dimension_numbers = #tpu.dot_dimension_numbers<[1], [0], [0], [1], [0, 0, 1, 1], [], []>} : vector<16x128xbf16>, vector<128x128xbf16>, vector<16x128xf32> -> vector<16x128xf32>
    %12 = vector.broadcast %9 : vector<1x128xf32> to vector<16x128xf32>
    %13 = arith.addf %11, %12 : vector<16x128xf32>
    %cst_11 = arith.constant 0.000000e+00 : f32
    %14 = vector.broadcast %cst_11 : f32 to vector<16x128xf32>
    %15 = arith.maximumf %13, %14 : vector<16x128xf32>
    %c0_12 = arith.constant 0 : index
    %c0_13 = arith.constant 0 : index
    %16 = vector.load %arg6[%c0_12, %c0_13] : memref<128x128xbf16, #tpu.memory_space<vmem>>, vector<128x128xbf16>
    %c0_14 = arith.constant 0 : index
    %c0_15 = arith.constant 0 : index
    %17 = vector.load %arg7[%c0_14, %c0_15] : memref<1x128xf32, #tpu.memory_space<vmem>>, vector<1x128xf32>
    %18 = arith.truncf %15 : vector<16x128xf32> to vector<16x128xbf16>
    %cst_16 = arith.constant dense<0.000000e+00> : vector<16x128xf32>
    %19 = tpu.matmul %18, %16, %cst_16 {dimension_numbers = #tpu.dot_dimension_numbers<[1], [0], [0], [1], [0, 0, 1, 1], [], []>} : vector<16x128xbf16>, vector<128x128xbf16>, vector<16x128xf32> -> vector<16x128xf32>
    %20 = vector.broadcast %17 : vector<1x128xf32> to vector<16x128xf32>
    %21 = arith.addf %19, %20 : vector<16x128xf32>
    %22 = tpu.iota {dimensions = array<i32: 1>} : vector<16x128xi32>
    %c8_i32 = arith.constant 8 : i32
    %23 = vector.broadcast %c8_i32 : i32 to vector<16x128xi32>
    %24 = arith.cmpi slt, %22, %23 : vector<16x128xi32>
    %cst_17 = arith.constant -1.000000e+30 : f32
    %25 = vector.broadcast %cst_17 : f32 to vector<16x128xf32>
    %26 = arith.select %24, %21, %25 : vector<16x128xi1>, vector<16x128xf32>
    %cst_18 = arith.constant dense<0xFF800000> : vector<16xf32>
    %27 = vector.multi_reduction <maximumf>, %26, %cst_18 [1] : vector<16x128xf32> to vector<16xf32>
    %28 = vector.shape_cast %27 : vector<16xf32> to vector<16x1xf32>
    %29 = vector.broadcast %28 : vector<16x1xf32> to vector<16x128xf32>
    %30 = arith.subf %26, %29 : vector<16x128xf32>
    %31 = math.exp %30 : vector<16x128xf32>
    %cst_19 = arith.constant dense<0.000000e+00> : vector<16xf32>
    %32 = vector.multi_reduction <add>, %31, %cst_19 [1] : vector<16x128xf32> to vector<16xf32>
    %33 = vector.shape_cast %32 : vector<16xf32> to vector<16x1xf32>
    %34 = tpu.reciprocal %33 {approx = true} : vector<16x1xf32> -> vector<16x1xf32>
    %35 = vector.broadcast %34 : vector<16x1xf32> to vector<16x128xf32>
    %36 = arith.mulf %31, %35 : vector<16x128xf32>
    %c0_20 = arith.constant 0 : index
    %c0_21 = arith.constant 0 : index
    %37 = vector.load %arg8[%c0_20, %c0_21] : memref<16x128xf32, #tpu.memory_space<vmem>>, vector<16x128xf32>
    tpu.vector_store %arg8[%c0_20, %c0_21], %36 {strides = array<i32>} : memref<16x128xf32, #tpu.memory_space<vmem>>, vector<16x128xf32>,
    return
  }
  func.func @transform_0(%arg0: i32) -> (i32, i32) {
    %c0_i32 = arith.constant 0 : i32
    %c0_i32_0 = arith.constant 0 : i32
    return %arg0, %c0_i32 : i32, i32
  }
  func.func @transform_1(%arg0: i32) -> (i32, i32) {
    %c0_i32 = arith.constant 0 : i32
    %c0_i32_0 = arith.constant 0 : i32
    %c0_i32_1 = arith.constant 0 : i32
    return %c0_i32, %c0_i32_0 : i32, i32
  }
  func.func @transform_2(%arg0: i32) -> (i32, i32) {
    %c0_i32 = arith.constant 0 : i32
    %c0_i32_0 = arith.constant 0 : i32
    %c0_i32_1 = arith.constant 0 : i32
    return %c0_i32, %c0_i32_0 : i32, i32
  }
  func.func @transform_3(%arg0: i32) -> (i32, i32) {
    %c0_i32 = arith.constant 0 : i32
    %c0_i32_0 = arith.constant 0 : i32
    %c0_i32_1 = arith.constant 0 : i32
    return %c0_i32, %c0_i32_0 : i32, i32
  }
  func.func @transform_4(%arg0: i32) -> (i32, i32) {
    %c0_i32 = arith.constant 0 : i32
    %c0_i32_0 = arith.constant 0 : i32
    %c0_i32_1 = arith.constant 0 : i32
    return %c0_i32, %c0_i32_0 : i32, i32
  }
  func.func @transform_5(%arg0: i32) -> (i32, i32) {
    %c0_i32 = arith.constant 0 : i32
    %c0_i32_0 = arith.constant 0 : i32
    %c0_i32_1 = arith.constant 0 : i32
    return %c0_i32, %c0_i32_0 : i32, i32
  }
  func.func @transform_6(%arg0: i32) -> (i32, i32) {
    %c0_i32 = arith.constant 0 : i32
    %c0_i32_0 = arith.constant 0 : i32
    %c0_i32_1 = arith.constant 0 : i32
    return %c0_i32, %c0_i32_0 : i32, i32
  }
  func.func @transform_7(%arg0: i32) -> (i32, i32) {
    %c0_i32 = arith.constant 0 : i32
    %c0_i32_0 = arith.constant 0 : i32
    return %arg0, %c0_i32 : i32, i32
  }
}

</mosaic_0001>

<llo_original>
// kernel: tpu_custom_call.1
$region0: #{tpu_custom_call.1}
  #allocation0 [shape = 'u32[]', space=smem, size = 0x4, offset = 0x4, fixed_abs, tag = 'smem constant byte address 0x4 - core index']
  #allocation1 [shape = 'u32[72,128]{1,0:T(1,128)}', space=vmem, size = 0x9000, scoped, tag = 'internal scratch']
  %s0 = inlined_call_operand.hbm [shape: bf16[16,128], index: 0, kind: input, shape index: {}]
  %s1 = inlined_call_operand.hbm [shape: bf16[128,128], index: 1, kind: input, shape index: {}]
  %s2 = inlined_call_operand.vmem [shape: f32[1,128], index: 2, kind: input, shape index: {}]
  %s3 = inlined_call_operand.hbm [shape: bf16[128,128], index: 3, kind: input, shape index: {}]
  %s4 = inlined_call_operand.vmem [shape: f32[1,128], index: 4, kind: input, shape index: {}]
  %s5 = inlined_call_operand.hbm [shape: bf16[128,128], index: 5, kind: input, shape index: {}]
  %s6 = inlined_call_operand.vmem [shape: f32[1,128], index: 6, kind: input, shape index: {}]
  %s7 = inlined_call_operand.hbm [shape: f32[16,128], index: 7, kind: output, shape index: {}]
  %s8 = sld [smem:[#allocation0]]
  $region54: #{tpu_custom_call.1} parent=0
    _
  %s10 = ssub.s32 1, %s8
  %s11 = scalar_select 0, %s10, %s8
  $region1: #{tpu_custom_call.1} parent=0
    #allocation2 [shape = 'u8[4096]{0}', space=vmem, size = 0x1000, scoped, tag = 'input window, operand 0, single buffered']
    #allocation3 [shape = 's32[1]{0}', space=sflag, size = 0x4, scoped, tag = 'scoped memory for tpu_custom_call.1']
    #allocation4 [shape = 's32[1]{0}', space=sflag, size = 0x4, scoped, tag = 'scoped memory for tpu_custom_call.1']
    #allocation5 [shape = 'u8[32768]{0}', space=vmem, size = 0x8000, scoped, tag = 'input window, operand 1, single buffered']
    #allocation6 [shape = 's32[1]{0}', space=sflag, size = 0x4, scoped, tag = 'scoped memory for tpu_custom_call.1']
    #allocation7 [shape = 'u8[32768]{0}', space=vmem, size = 0x8000, scoped, tag = 'input window, operand 3, single buffered']
    #allocation8 [shape = 'u8[32768]{0}', space=vmem, size = 0x8000, scoped, tag = 'input window, operand 5, single buffered']
    #allocation9 [shape = 's32[1]{0}', space=sflag, size = 0x4, scoped, tag = 'scoped memory for tpu_custom_call.1']
    #allocation10 [shape = 'u8[8192]{0}', space=vmem, size = 0x2000, scoped, tag = 'output window, operand 0, single buffered']
    %12 = vsyncpa [#allocation3], 0
    %13 = vsyncpa [#allocation6], 0
    %14 = vsyncpa [#allocation9], 0
    %15 = vsyncpa [#allocation4], 0
    // Predicated region
    $region2: #{tpu_custom_call.1} parent=1 // pred_check
      _
    $region3: #{tpu_custom_call.1} parent=1 // pred_check_branch
      %17 = sbr.rel (0) target = $region5
    $region4: #{tpu_custom_call.1} parent=1 // pred_region
      %19 = vsyncadd [#allocation3], 0
      %s20 = sshll.u32 %s0, 4
      %s21 = int_to_ptr.hbm [resolvable:$true] %s20
      %s22 = sshll.u32 [#allocation2], 4
      %s23 = int_to_ptr.vmem [resolvable:$true] %s22
      %28 = dma.hbm_to_vmem [thread:$0]  %s21, 128, %s23, [#allocation3], 64, 64, 4
    $region5: #{tpu_custom_call.1} parent=1 // pred_fallthru
      _
    // Predicated region
    $region6: #{tpu_custom_call.1} parent=1 // pred_check
      _
    $region7: #{tpu_custom_call.1} parent=1 // pred_check_branch
      %30 = sbr.rel (0) target = $region9
    $region8: #{tpu_custom_call.1} parent=1 // pred_region
      %32 = vsyncadd [#allocation6], 0
      %s33 = sshll.u32 %s1, 4
      %s34 = int_to_ptr.hbm [resolvable:$true] %s33
      %s35 = sshll.u32 [#allocation5], 4
      %s36 = int_to_ptr.vmem [resolvable:$true] %s35
      %41 = dma.hbm_to_vmem [thread:$0]  %s34, 1024, %s36, [#allocation6], 64, 64, 4
    $region9: #{tpu_custom_call.1} parent=1 // pred_fallthru
      _
    // Predicated region
    $region10: #{tpu_custom_call.1} parent=1 // pred_check
      _
    $region11: #{tpu_custom_call.1} parent=1 // pred_check_branch
      %43 = sbr.rel (0) target = $region13
    $region12: #{tpu_custom_call.1} parent=1 // pred_region
      _
    $region13: #{tpu_custom_call.1} parent=1 // pred_fallthru
      _
    // Predicated region
    $region14: #{tpu_custom_call.1} parent=1 // pred_check
      _
    $region15: #{tpu_custom_call.1} parent=1 // pred_check_branch
      %45 = sbr.rel (0) target = $region17
    $region16: #{tpu_custom_call.1} parent=1 // pred_region
      %47 = vsyncadd [#allocation6], 0
      %s48 = sshll.u32 %s3, 4
      %s49 = int_to_ptr.hbm [resolvable:$true] %s48
      %s50 = sshll.u32 [#allocation7], 4
      %s51 = int_to_ptr.vmem [resolvable:$true] %s50
      %56 = dma.hbm_to_vmem [thread:$0]  %s49, 1024, %s51, [#allocation6], 64, 64, 4
    $region17: #{tpu_custom_call.1} parent=1 // pred_fallthru
      _
    // Predicated region
    $region18: #{tpu_custom_call.1} parent=1 // pred_check
      _
    $region19: #{tpu_custom_call.1} parent=1 // pred_check_branch
      %58 = sbr.rel (0) target = $region21
    $region20: #{tpu_custom_call.1} parent=1 // pred_region
      _
    $region21: #{tpu_custom_call.1} parent=1 // pred_fallthru
      _
    // Predicated region
    $region22: #{tpu_custom_call.1} parent=1 // pred_check
      _
    $region23: #{tpu_custom_call.1} parent=1 // pred_check_branch
      %60 = sbr.rel (0) target = $region25
    $region24: #{tpu_custom_call.1} parent=1 // pred_region
      %62 = vsyncadd [#allocation9], 0
      %s63 = sshll.u32 %s5, 4
      %s64 = int_to_ptr.hbm [resolvable:$true] %s63
      %s65 = sshll.u32 [#allocation8], 4
      %s66 = int_to_ptr.vmem [resolvable:$true] %s65
      %71 = dma.hbm_to_vmem [thread:$0]  %s64, 1024, %s66, [#allocation9], 64, 64, 4
    $region25: #{tpu_custom_call.1} parent=1 // pred_fallthru
      _
    // Predicated region
    $region26: #{tpu_custom_call.1} parent=1 // pred_check
      _
    $region27: #{tpu_custom_call.1} parent=1 // pred_check_branch
      %73 = sbr.rel (0) target = $region29
    $region28: #{tpu_custom_call.1} parent=1 // pred_region
      _
    $region29: #{tpu_custom_call.1} parent=1 // pred_fallthru
      _
    // Predicated region
    $region30: #{tpu_custom_call.1} parent=1 // pred_check
      _
    $region31: #{tpu_custom_call.1} parent=1 // pred_check_branch
      %75 = sbr.rel (0) target = $region33
    $region32: #{tpu_custom_call.1} parent=1 // pred_region
      %77 = dma.done [#allocation3], 128
    $region33: #{tpu_custom_call.1} parent=1 // pred_fallthru
      _
    // Predicated region
    $region34: #{tpu_custom_call.1} parent=1 // pred_check
      _
    $region35: #{tpu_custom_call.1} parent=1 // pred_check_branch
      %79 = sbr.rel (0) target = $region37
    $region36: #{tpu_custom_call.1} parent=1 // pred_region
      %81 = dma.done [#allocation6], 1024
    $region37: #{tpu_custom_call.1} parent=1 // pred_fallthru
      _
    // Predicated region
    $region38: #{tpu_custom_call.1} parent=1 // pred_check
      _
    $region39: #{tpu_custom_call.1} parent=1 // pred_check_branch
      %83 = sbr.rel (0) target = $region41
    $region40: #{tpu_custom_call.1} parent=1 // pred_region
      %85 = dma.done [#allocation6], 1024
    $region41: #{tpu_custom_call.1} parent=1 // pred_fallthru
      _
    // Predicated region
    $region42: #{tpu_custom_call.1} parent=1 // pred_check
      _
    $region43: #{tpu_custom_call.1} parent=1 // pred_check_branch
      %87 = sbr.rel (0) target = $region45
    $region44: #{tpu_custom_call.1} parent=1 // pred_region
      %89 = dma.done [#allocation9], 1024
    $region45: #{tpu_custom_call.1} parent=1 // pred_fallthru
      _
    %v90 = vld [vmem:[#allocation2] sm:$0xf]
    %v91 = vld [vmem:[#allocation2 + $0x4] sm:$0xf]
    %v92 = vld [vmem:[#allocation5] sm:$0xf]
    %v93 = vld [vmem:[#allocation5 + $0x4] sm:$0xf]
    %v94 = vld [vmem:[#allocation5 + $0x8] sm:$0xf]
    %v95 = vld [vmem:[#allocation5 + $0xc] sm:$0xf]
    %v96 = vld [vmem:[#allocation5 + $0x10] sm:$0xf]
    %v97 = vld [vmem:[#allocation5 + $0x14] sm:$0xf]
    %v98 = vld [vmem:[#allocation5 + $0x18] sm:$0xf]
    %v99 = vld [vmem:[#allocation5 + $0x1c] sm:$0xf]
    %v100 = vld [vmem:[#allocation5 + $0x20] sm:$0xf]
    %v101 = vld [vmem:[#allocation5 + $0x24] sm:$0xf]
    %v102 = vld [vmem:[#allocation5 + $0x28] sm:$0xf]
    %v103 = vld [vmem:[#allocation5 + $0x2c] sm:$0xf]
    %v104 = vld [vmem:[#allocation5 + $0x30] sm:$0xf]
    %v105 = vld [vmem:[#allocation5 + $0x34] sm:$0xf]
    %v106 = vld [vmem:[#allocation5 + $0x38] sm:$0xf]
    %v107 = vld [vmem:[#allocation5 + $0x3c] sm:$0xf]
    %v108 = vld [vmem:[%s2] sm:$0x1]
    %v110 = vperm.slane %v108, 0
    %v114 = vunpack.c.l.b16 %v90
    %v115 = vunpack.c.l.b16 %v91
    %v116 = vpack.c.b16 %v115, %v114
    %v134 = vunpack.c.l.b16 %v92
    %v135 = vunpack.c.l.b16 %v93
    %v136 = vunpack.c.l.b16 %v94
    %v137 = vunpack.c.l.b16 %v95
    %v138 = vunpack.c.l.b16 %v96
    %v139 = vunpack.c.l.b16 %v97
    %v140 = vunpack.c.l.b16 %v98
    %v141 = vunpack.c.l.b16 %v99
    %v142 = vunpack.c.l.b16 %v100
    %v143 = vunpack.c.l.b16 %v101
    %v144 = vunpack.c.l.b16 %v102
    %v145 = vunpack.c.l.b16 %v103
    %v146 = vunpack.c.l.b16 %v104
    %v147 = vunpack.c.l.b16 %v105
    %v148 = vunpack.c.l.b16 %v106
    %v149 = vunpack.c.l.b16 %v107
    %v150 = vpack.c.b16 %v135, %v134
    %v151 = vpack.c.b16 %v137, %v136
    %v152 = vpack.c.b16 %v139, %v138
    %v153 = vpack.c.b16 %v141, %v140
    %v154 = vpack.c.b16 %v143, %v142
    %v155 = vpack.c.b16 %v145, %v144
    %v156 = vpack.c.b16 %v147, %v146
    %v157 = vpack.c.b16 %v149, %v148
    %166 = vmatpush.bf16.msra.mxu0 %v157
    %167 = vmatpush.bf16.msra.mxu0 %v156
    %168 = vmatpush.bf16.msra.mxu0 %v155
    %169 = vmatpush.bf16.msra.mxu0 %v154
    %170 = vmatpush.bf16.msra.mxu0 %v153
    %171 = vmatpush.bf16.msra.mxu0 %v152
    %172 = vmatpush.bf16.msra.mxu0 %v151
    %173 = vmatpush.bf16.msra.mxu0 %v150
    %174 = vmatmul.bf16.gmra.mxu0 %v116
    %v175 = vpop.f32.mrf.mxu0
    %v176 = vadd.f32 %v110, %v175
    %v177 = vpop.f32.mrf.mxu0
    %v178 = vadd.f32 %v110, %v177
    %179 = vdwg.mxu0
    %v180 = vmax.f32 %v176, 0.0
    %v181 = vmax.f32 %v178, 0.0
    %v182 = vld [vmem:[#allocation7] sm:$0xf]
    %v183 = vld [vmem:[#allocation7 + $0x4] sm:$0xf]
    %v184 = vld [vmem:[#allocation7 + $0x8] sm:$0xf]
    %v185 = vld [vmem:[#allocation7 + $0xc] sm:$0xf]
    %v186 = vld [vmem:[#allocation7 + $0x10] sm:$0xf]
    %v187 = vld [vmem:[#allocation7 + $0x14] sm:$0xf]
    %v188 = vld [vmem:[#allocation7 + $0x18] sm:$0xf]
    %v189 = vld [vmem:[#allocation7 + $0x1c] sm:$0xf]
    %v190 = vld [vmem:[#allocation7 + $0x20] sm:$0xf]
    %v191 = vld [vmem:[#allocation7 + $0x24] sm:$0xf]
    %v192 = vld [vmem:[#allocation7 + $0x28] sm:$0xf]
    %v193 = vld [vmem:[#allocation7 + $0x2c] sm:$0xf]
    %v194 = vld [vmem:[#allocation7 + $0x30] sm:$0xf]
    %v195 = vld [vmem:[#allocation7 + $0x34] sm:$0xf]
    %v196 = vld [vmem:[#allocation7 + $0x38] sm:$0xf]
    %v197 = vld [vmem:[#allocation7 + $0x3c] sm:$0xf]
    %v198 = vld [vmem:[%s4] sm:$0x1]
    %v199 = vpack.c.bf16 %v181, %v180
    %v201 = vperm.slane %v198, 0
    %v219 = vunpack.c.l.b16 %v182
    %v220 = vunpack.c.l.b16 %v183
    %v221 = vunpack.c.l.b16 %v184
    %v222 = vunpack.c.l.b16 %v185
    %v223 = vunpack.c.l.b16 %v186
    %v224 = vunpack.c.l.b16 %v187
    %v225 = vunpack.c.l.b16 %v188
    %v226 = vunpack.c.l.b16 %v189
    %v227 = vunpack.c.l.b16 %v190
    %v228 = vunpack.c.l.b16 %v191
    %v229 = vunpack.c.l.b16 %v192
    %v230 = vunpack.c.l.b16 %v193
    %v231 = vunpack.c.l.b16 %v194
    %v232 = vunpack.c.l.b16 %v195
    %v233 = vunpack.c.l.b16 %v196
    %v234 = vunpack.c.l.b16 %v197
    %v235 = vpack.c.b16 %v220, %v219
    %v236 = vpack.c.b16 %v222, %v221
    %v237 = vpack.c.b16 %v224, %v223
    %v238 = vpack.c.b16 %v226, %v225
    %v239 = vpack.c.b16 %v228, %v227
    %v240 = vpack.c.b16 %v230, %v229
    %v241 = vpack.c.b16 %v232, %v231
    %v242 = vpack.c.b16 %v234, %v233
    %251 = vmatpush.bf16.msra.mxu0 %v242
    %252 = vmatpush.bf16.msra.mxu0 %v241
    %253 = vmatpush.bf16.msra.mxu0 %v240
    %254 = vmatpush.bf16.msra.mxu0 %v239
    %255 = vmatpush.bf16.msra.mxu0 %v238
    %256 = vmatpush.bf16.msra.mxu0 %v237
    %257 = vmatpush.bf16.msra.mxu0 %v236
    %258 = vmatpush.bf16.msra.mxu0 %v235
    %259 = vmatmul.bf16.gmra.mxu0 %v199
    %v260 = vpop.f32.mrf.mxu0
    %v261 = vadd.f32 %v201, %v260
    %v262 = vpop.f32.mrf.mxu0
    %v263 = vadd.f32 %v201, %v262
    %264 = vdwg.mxu0
    %v265 = vmax.f32 %v261, 0.0
    %v266 = vmax.f32 %v263, 0.0
    %v267 = vld [vmem:[#allocation8] sm:$0xf]
    %v268 = vld [vmem:[#allocation8 + $0x4] sm:$0xf]
    %v269 = vld [vmem:[#allocation8 + $0x8] sm:$0xf]
    %v270 = vld [vmem:[#allocation8 + $0xc] sm:$0xf]
    %v271 = vld [vmem:[#allocation8 + $0x10] sm:$0xf]
    %v272 = vld [vmem:[#allocation8 + $0x14] sm:$0xf]
    %v273 = vld [vmem:[#allocation8 + $0x18] sm:$0xf]
    %v274 = vld [vmem:[#allocation8 + $0x1c] sm:$0xf]
    %v275 = vld [vmem:[#allocation8 + $0x20] sm:$0xf]
    %v276 = vld [vmem:[#allocation8 + $0x24] sm:$0xf]
    %v277 = vld [vmem:[#allocation8 + $0x28] sm:$0xf]
    %v278 = vld [vmem:[#allocation8 + $0x2c] sm:$0xf]
    %v279 = vld [vmem:[#allocation8 + $0x30] sm:$0xf]
    %v280 = vld [vmem:[#allocation8 + $0x34] sm:$0xf]
    %v281 = vld [vmem:[#allocation8 + $0x38] sm:$0xf]
    %v282 = vld [vmem:[#allocation8 + $0x3c] sm:$0xf]
    %v283 = vld [vmem:[%s6] sm:$0x1]
    %v284 = vpack.c.bf16 %v266, %v265
    %v286 = vperm.slane %v283, 0
    %v304 = vunpack.c.l.b16 %v267
    %v305 = vunpack.c.l.b16 %v268
    %v306 = vunpack.c.l.b16 %v269
    %v307 = vunpack.c.l.b16 %v270
    %v308 = vunpack.c.l.b16 %v271
    %v309 = vunpack.c.l.b16 %v272
    %v310 = vunpack.c.l.b16 %v273
    %v311 = vunpack.c.l.b16 %v274
    %v312 = vunpack.c.l.b16 %v275
    %v313 = vunpack.c.l.b16 %v276
    %v314 = vunpack.c.l.b16 %v277
    %v315 = vunpack.c.l.b16 %v278
    %v316 = vunpack.c.l.b16 %v279
    %v317 = vunpack.c.l.b16 %v280
    %v318 = vunpack.c.l.b16 %v281
    %v319 = vunpack.c.l.b16 %v282
    %v320 = vpack.c.b16 %v305, %v304
    %v321 = vpack.c.b16 %v307, %v306
    %v322 = vpack.c.b16 %v309, %v308
    %v323 = vpack.c.b16 %v311, %v310
    %v324 = vpack.c.b16 %v313, %v312
    %v325 = vpack.c.b16 %v315, %v314
    %v326 = vpack.c.b16 %v317, %v316
    %v327 = vpack.c.b16 %v319, %v318
    %336 = vmatpush.bf16.msra.mxu0 %v327
    %337 = vmatpush.bf16.msra.mxu0 %v326
    %338 = vmatpush.bf16.msra.mxu0 %v325
    %339 = vmatpush.bf16.msra.mxu0 %v324
    %340 = vmatpush.bf16.msra.mxu0 %v323
    %341 = vmatpush.bf16.msra.mxu0 %v322
    %342 = vmatpush.bf16.msra.mxu0 %v321
    %343 = vmatpush.bf16.msra.mxu0 %v320
    %344 = vmatmul.bf16.gmra.mxu0 %v284
    %v345 = vpop.f32.mrf.mxu0
    %v346 = vadd.f32 %v286, %v345
    %v347 = vpop.f32.mrf.mxu0
    %v348 = vadd.f32 %v286, %v347
    %349 = vdwg.mxu0
    %v350 = vlaneseq
    %v351 = vand.u32 %v350, 127
    %vm352 = vcmp.lt.s32.totalorder %v351, 8
    %v353 = vsel %vm352, %v346, -1e+30
    %v354 = vsel %vm352, %v348, -1e+30
    %355 = vmax.xlane.f32.xlu0 %v353
    %v356 = vpop.xlane.xlu0 %355
    %357 = vmax.xlane.f32.xlu0 %v354
    %v358 = vpop.xlane.xlu0 %357
    %v359 = vsub.f32 %v353, %v356
    %v360 = vsub.f32 %v354, %v358
    %v361 = vmul.f32 %v359, 1.442695
    %v362 = vpow.pop %v361
    %v363 = vmul.f32 %v360, 1.442695
    %v364 = vpow.pop %v363
    %365 = vadd.xlane.f32.xlu0 %v362
    %v366 = vpop.xlane.xlu0 %365
    %367 = vadd.xlane.f32.xlu0 %v364
    %v368 = vpop.xlane.xlu0 %367
    %v369 = vrcp.pop %v366
    %v370 = vrcp.pop %v368
    %v371 = vmul.f32 %v362, %v369
    %v372 = vmul.f32 %v364, %v370
    %373 = vst [vmem:[#allocation10] sm:$0xff] %v371
    %374 = vst [vmem:[#allocation10 + $0x8] sm:$0xff] %v372
    // Predicated region
    $region46: #{tpu_custom_call.1} parent=1 // pred_check
      _
    $region47: #{tpu_custom_call.1} parent=1 // pred_check_branch
      %376 = sbr.rel (0) target = $region49
    $region48: #{tpu_custom_call.1} parent=1 // pred_region
      %378 = vsyncadd [#allocation4], 0
      %s379 = sshll.u32 [#allocation10], 4
      %s380 = int_to_ptr.vmem [resolvable:$true] %s379
      %s381 = sshll.u32 %s7, 4
      %s382 = int_to_ptr.hbm [resolvable:$true] %s381
      %387 = dma.vmem_to_hbm [thread:$0]  %s380, 256, %s382, [#allocation4], 128, 128, 8
    $region49: #{tpu_custom_call.1} parent=1 // pred_fallthru
      _
    // Predicated region
    $region50: #{tpu_custom_call.1} parent=1 // pred_check
      _
    $region51: #{tpu_custom_call.1} parent=1 // pred_check_branch
      %389 = sbr.rel (0) target = $region53
    $region52: #{tpu_custom_call.1} parent=1 // pred_region
      %391 = dma.done [#allocation4], 256
    $region53: #{tpu_custom_call.1} parent=1 // pred_fallthru
      _
    %392 = vsyncpa [#allocation3], 1
    %393 = vsyncpa [#allocation6], 1
    %394 = vsyncpa [#allocation9], 1
    %395 = vsyncpa [#allocation4], 1

</llo_original>
